<compile_context>
chip_gen: v7x
topology: tpu7x:2x2x1
jax: 0.10.0
libtpu: 0.0.40
codegen_flags: <defaults>
</compile_context>

<pallas_src>
import jax
import jax.numpy as jnp
from jax import lax
from jax.experimental import pallas as pl
from jax.experimental.pallas import tpu as pltpu

_EPS = 1e-6  # matches F.normalize(..., eps=1e-6)


def _round_up(x, m):
    return ((x + m - 1) // m) * m


def _l2normalize(x):
    n = jnp.sqrt(jnp.sum(x * x, axis=-1, keepdims=True))
    return x / jnp.maximum(n, _EPS)


def _safe_pow(x, p):
    # matches torch.pow for x >= 0 with float exponent (0**p == 0 for p > 0)
    return jnp.where(x > 0.0, jnp.exp(p * jnp.log(jnp.maximum(x, 1e-30))), 0.0)


# --------------------------------------------------------------------------
# Kernel 1: per-vertex Gouraud lighting (_apply_lighting + shaded colors)
# Lane-dense SoA layout: (3, TV) blocks, vertices on lanes, params in SMEM.
# --------------------------------------------------------------------------
def _vertex_shade_kernel(params_ref, verts_ref, normals_ref, vcol_ref, out_ref):
    # params_ref (SMEM, (9, 3) f32) rows:
    #   0 light_location, 1 light_ambient, 2 light_diffuse, 3 light_specular,
    #   4 mat_ambient, 5 mat_diffuse, 6 mat_specular, 7 camera_center,
    #   8 [shininess, 0, 0]
    def row(r):
        return params_ref[r, 0], params_ref[r, 1], params_ref[r, 2]

    plx, ply, plz = row(0)
    lar, lag, lab = row(1)
    ldr, ldg, ldb = row(2)
    lsr, lsg, lsb = row(3)
    mar, mag, mab = row(4)
    mdr, mdg, mdb = row(5)
    msr, msg, msb = row(6)
    cx, cy, cz = row(7)
    shin = params_ref[8, 0]

    vx = verts_ref[0:1, :]
    vy = verts_ref[1:2, :]
    vz = verts_ref[2:3, :]
    nx = normals_ref[0:1, :]
    ny = normals_ref[1:2, :]
    nz = normals_ref[2:3, :]

    eps_sq = _EPS * _EPS

    # normalize(normals): x / max(||x||, eps) == x * rsqrt(max(||x||^2, eps^2))
    inv_nn = lax.rsqrt(jnp.maximum(nx * nx + ny * ny + nz * nz, eps_sq))
    nx, ny, nz = nx * inv_nn, ny * inv_nn, nz * inv_nn

    # direction = normalize(light_location - verts)
    dx, dy, dz = plx - vx, ply - vy, plz - vz
    inv_dn = lax.rsqrt(jnp.maximum(dx * dx + dy * dy + dz * dz, eps_sq))
    dx, dy, dz = dx * inv_dn, dy * inv_dn, dz * inv_dn

    cos_angle = nx * dx + ny * dy + nz * dz                  # (1, TV)
    angle = jnp.maximum(cos_angle, 0.0)

    # specular
    mask = jnp.where(cos_angle > 0.0, 1.0, 0.0)
    wx, wy, wz = cx - vx, cy - vy, cz - vz
    inv_wn = lax.rsqrt(jnp.maximum(wx * wx + wy * wy + wz * wz, eps_sq))
    wx, wy, wz = wx * inv_wn, wy * inv_wn, wz * inv_wn
    rx = -dx + 2.0 * cos_angle * nx
    ry = -dy + 2.0 * cos_angle * ny
    rz = -dz + 2.0 * cos_angle * nz
    alpha = jnp.maximum(wx * rx + wy * ry + wz * rz, 0.0) * mask
    # torch.pow(alpha, shininess) with 0**p == 0 for p > 0 (exp/log on EUP)
    spec = jnp.where(alpha > 0.0,
                     jnp.exp(shin * jnp.log(jnp.maximum(alpha, 1e-30))),
                     0.0)                                    # (1, TV)

    # verts_colors_shaded = vcol * (ambient + diffuse) + specular (per channel)
    out_ref[0:1, :] = (vcol_ref[0:1, :] * (mar * lar + mdr * ldr * angle)
                       + msr * lsr * spec)
    out_ref[1:2, :] = (vcol_ref[1:2, :] * (mag * lag + mdg * ldg * angle)
                       + msg * lsg * spec)
    out_ref[2:3, :] = (vcol_ref[2:3, :] * (mab * lab + mdb * ldb * angle)
                       + msb * lsb * spec)


def _shade_vertices(verts, normals, vcolors, params, *, tv=2048):
    """Returns shaded vertex colors of shape (V, 3) float32."""
    V = verts.shape[0]
    tv = min(tv, _round_up(V, 128))
    V_pad = _round_up(V, tv)

    def planarize(a):
        a = a.astype(jnp.float32).T                          # (3, V)
        return jnp.pad(a, ((0, 0), (0, V_pad - V)))          # (3, V_pad)

    verts_pl = planarize(verts)
    normals_pl = planarize(normals)
    vcol_pl = planarize(vcolors)

    out = pl.pallas_call(
        _vertex_shade_kernel,
        out_shape=jax.ShapeDtypeStruct((3, V_pad), jnp.float32),
        grid=(V_pad // tv,),
        in_specs=[
            pl.BlockSpec(memory_space=pltpu.MemorySpace.SMEM),   # params (9,3)
            pl.BlockSpec((3, tv), lambda i: (0, i)),             # verts
            pl.BlockSpec((3, tv), lambda i: (0, i)),             # normals
            pl.BlockSpec((3, tv), lambda i: (0, i)),             # vertex colors
        ],
        out_specs=pl.BlockSpec((3, tv), lambda i: (0, i)),
        compiler_params=pltpu.CompilerParams(
            dimension_semantics=("parallel",),
            vmem_limit_bytes=32 * 1024 * 1024),
    )(params, verts_pl, normals_pl, vcol_pl)
    return out[:, :V].T                                          # (V, 3)


# --------------------------------------------------------------------------
# Kernel 2: barycentric interpolation (k = 0) fused with hard_rgb_blend.
# Lane-dense: pixels on lanes, planar in/out slabs, bf16 MXU one-hot gather
# with hi/lo face-color split and a tiled (accumulated) face axis.
# --------------------------------------------------------------------------
def _pixel_blend_kernel(bg_ref, idx_ref, bary_ref, fcol_ref, out_ref, acc_ref):
    # bg_ref:   SMEM (1, 3) f32 background color
    # idx_ref:  VMEM (1, TP) i32  pix_to_face, k = 0  (-1 == background)
    # bary_ref: VMEM (3, TP) f32  barycentrics, k = 0, planar
    # fcol_ref: VMEM (18, TF) bf16: rows 0..8 = hi part, rows 9..17 = residual
    #           (row 3*v + c = channel c of face-vertex v)
    # out_ref:  VMEM (4, TP) f32  planar RGBA (resident across the F axis)
    # acc_ref:  VMEM (9, TP) f32  gathered-face-color accumulator
    j = pl.program_id(1)
    tf = fcol_ref.shape[1]
    tp = idx_ref.shape[1]

    @pl.when(j == 0)
    def _():
        acc_ref[...] = jnp.zeros_like(acc_ref)

    idx = idx_ref[...]                                       # (1, TP)
    f_off = j * tf

    # One-hot gather on the MXU: (18, TF)bf16 @ (TF, TP)bf16 -> (18, TP) f32.
    # Background pixels (idx == -1) match no face -> contribute zeros.
    onehot = (lax.broadcasted_iota(jnp.int32, (tf, tp), 0) + f_off == idx
              ).astype(jnp.bfloat16)
    g = jnp.dot(fcol_ref[...], onehot,
                preferred_element_type=jnp.float32)          # (18, TP)
    acc_ref[...] += g[0:9, :] + g[9:18, :]                   # hi + residual

    @pl.when(j == pl.num_programs(1) - 1)
    def _():
        gathered = acc_ref[...]                              # (9, TP)
        b0 = bary_ref[0:1, :]
        b1 = bary_ref[1:2, :]
        b2 = bary_ref[2:3, :]
        rgb = (b0 * gathered[0:3, :] + b1 * gathered[3:6, :]
               + b2 * gathered[6:9, :])                      # (3, TP)

        # hard_rgb_blend: background pixels -> background color, alpha = !bg.
        # Row stores: lane axis fully dense (no concat / masked lane stores).
        is_bg = idx < 0
        out_ref[0:1, :] = jnp.where(is_bg, bg_ref[0, 0], rgb[0:1, :])
        out_ref[1:2, :] = jnp.where(is_bg, bg_ref[0, 1], rgb[1:2, :])
        out_ref[2:3, :] = jnp.where(is_bg, bg_ref[0, 2], rgb[2:3, :])
        out_ref[3:4, :] = jnp.where(is_bg, 0.0, 1.0)


def interpolate_and_blend(idx_k0, bary_k0, face_colors, bg, *,
                          tile_pixels=4096, tile_faces=512):
    """idx_k0: (P,) i32, bary_k0: (P,3) f32, face_colors: (F,9) f32, bg: (3,).
    Returns planar RGBA of shape (4, P) float32."""
    P = idx_k0.shape[0]
    F = face_colors.shape[0]
    tp = min(tile_pixels, _round_up(P, 128))
    P_pad = _round_up(P, tp)
    tf = min(tile_faces, _round_up(F, 128))
    F_pad = _round_up(F, tf)

    idx_pl = jnp.pad(idx_k0.reshape(1, P), ((0, 0), (0, P_pad - P)),
                     constant_values=-1)                      # (1, P_pad)
    bary_pl = jnp.pad(bary_k0.astype(jnp.float32).T,
                      ((0, 0), (0, P_pad - P)))               # (3, P_pad)

    # bf16 hi/lo split of the face-color table (gather stays MXU-friendly but
    # accurate to ~2^-18 relative after the f32 accumulation).
    fcolT = jnp.pad(face_colors.astype(jnp.float32).T,
                    ((0, 0), (0, F_pad - F)))                 # (9, F_pad) f32
    fcol_hi = fcolT.astype(jnp.bfloat16)
    fcol_lo = (fcolT - fcol_hi.astype(jnp.float32)).astype(jnp.bfloat16)
    fcol_packed = jnp.concatenate([fcol_hi, fcol_lo], axis=0)  # (18, F_pad)

    bg_smem = bg.reshape(1, 3).astype(jnp.float32)

    out = pl.pallas_call(
        _pixel_blend_kernel,
        out_shape=jax.ShapeDtypeStruct((4, P_pad), jnp.float32),
        grid=(P_pad // tp, F_pad // tf),                      # faces = reduction, last
        in_specs=[
            pl.BlockSpec(memory_space=pltpu.MemorySpace.SMEM),    # bg (1,3)
            pl.BlockSpec((1, tp), lambda i, j: (0, i)),           # pix_to_face k=0
            pl.BlockSpec((3, tp), lambda i, j: (0, i)),           # bary k=0 planar
            pl.BlockSpec((18, tf), lambda i, j: (0, j)),          # face colors hi/lo
        ],
        out_specs=pl.BlockSpec((4, tp), lambda i, j: (0, i)),
        scratch_shapes=[pltpu.VMEM((9, tp), jnp.float32)],
        compiler_params=pltpu.CompilerParams(
            dimension_semantics=("parallel", "arbitrary"),
            vmem_limit_bytes=32 * 1024 * 1024),
    )(bg_smem, idx_pl, bary_pl, fcol_packed)
    return out[:, :P]                                            # (4, P)


# --------------------------------------------------------------------------
# HardGouraudShader.forward equivalent
# --------------------------------------------------------------------------
def hard_gouraud_shader_forward(verts, normals, vcolors, faces,
                                pix_to_face, bary_coords,
                                light_location, l_amb, l_dif, l_spec,
                                m_amb, m_dif, m_spec, shininess,
                                cam_center, bg_color,
                                tile_pixels=4096, tile_faces=512):
    shin_row = jnp.concatenate(
        [jnp.reshape(shininess, (1, 1)).astype(jnp.float32),
         jnp.zeros((1, 2), jnp.float32)], axis=1)
    params = jnp.concatenate(
        [light_location, l_amb, l_dif, l_spec, m_amb, m_dif, m_spec,
         cam_center, shin_row], axis=0).astype(jnp.float32)       # (9, 3)

    shaded = _shade_vertices(verts, normals, vcolors, params)     # (V, 3)

    # tiny per-face vertex gather kept as JAX glue; column order v*3 + c
    face_colors = shaded[faces].reshape(faces.shape[0], 9)        # (F, 9)

    N, H, W, K = pix_to_face.shape
    P = N * H * W
    # drop unused K > 0 fragments before touching the kernel (mem-bound path)
    idx_k0 = pix_to_face.reshape(P, K)[:, 0].astype(jnp.int32)    # (P,)
    bary_k0 = bary_coords.reshape(P, K, 3)[:, 0, :]               # (P, 3)

    out_planar = interpolate_and_blend(
        idx_k0, bary_k0, face_colors, bg_color.astype(jnp.float32),
        tile_pixels=tile_pixels, tile_faces=tile_faces)           # (4, P)
    return out_planar.T.reshape(N, H, W, 4)


# --------------------------------------------------------------------------
# Pure-JAX reference (mirrors pytorch3d gouraud_shading + hard_rgb_blend)
# --------------------------------------------------------------------------
def reference_forward(verts, normals, vcolors, faces, pix_to_face, bary,
                      light_location, l_amb, l_dif, l_spec,
                      m_amb, m_dif, m_spec, shininess, cam_center, bg_color):
    n = _l2normalize(normals)
    direction = _l2normalize(light_location - verts)
    cos_angle = jnp.sum(n * direction, -1, keepdims=True)
    angle = jnp.maximum(cos_angle, 0.0)
    light_diffuse = l_dif * angle
    mask = (cos_angle > 0).astype(jnp.float32)
    view_dir = _l2normalize(cam_center - verts)
    reflect = -direction + 2.0 * cos_angle * n
    alpha = jnp.maximum(jnp.sum(view_dir * reflect, -1, keepdims=True), 0.0) * mask
    light_spec = l_spec * _safe_pow(alpha, shininess)
    shaded = vcolors * (m_amb * l_amb + m_dif * light_diffuse) + m_spec * light_spec

    face_colors = shaded[faces]                               # (F, 3, 3)
    idx = jnp.where(pix_to_face < 0, 0, pix_to_face)
    pfv = face_colors[idx]                                    # (N,H,W,K,3,3)
    pix_vals = jnp.sum(bary[..., None] * pfv, axis=-2)        # (N,H,W,K,3)
    pix_vals = jnp.where((pix_to_face < 0)[..., None], 0.0, pix_vals)
    is_bg = pix_to_face[..., 0] < 0
    rgb = jnp.where(is_bg[..., None], bg_color[None, None, None, :],
                    pix_vals[..., 0, :])
    a = (~is_bg).astype(jnp.float32)[..., None]
    return jnp.concatenate([rgb, a], axis=-1)


if __name__ == "__main__":
    key = jax.random.PRNGKey(0)
    ks = jax.random.split(key, 6)

    N, H, W, K = 2, 16, 16, 4      # fragments batch / image size / faces per pixel
    V, F = 96, 300                 # packed vertices / packed faces

    verts = jax.random.normal(ks[0], (V, 3), jnp.float32)
    normals = jax.random.normal(ks[1], (V, 3), jnp.float32)
    vcolors = jax.random.uniform(ks[2], (V, 3), jnp.float32)           # TexturesVertex
    faces = jax.random.randint(ks[3], (F, 3), 0, V)
    pix_to_face = jax.random.randint(ks[4], (N, H, W, K), -1, F).astype(jnp.int32)
    bary = jax.random.uniform(ks[5], (N, H, W, K, 3), jnp.float32, 1e-3, 1.0)
    bary = bary / jnp.sum(bary, axis=-1, keepdims=True)

    # PointLights / Materials / BlendParams defaults, deterministic camera center
    light_location = jnp.array([[0.0, 1.0, 0.0]], jnp.float32)
    l_amb = jnp.array([[0.5, 0.5, 0.5]], jnp.float32)
    l_dif = jnp.array([[0.3, 0.3, 0.3]], jnp.float32)
    l_spec = jnp.array([[0.2, 0.2, 0.2]], jnp.float32)
    m_amb = jnp.ones((1, 3), jnp.float32)
    m_dif = jnp.ones((1, 3), jnp.float32)
    m_spec = jnp.ones((1, 3), jnp.float32)
    shininess = jnp.float32(64.0)
    cam_center = jnp.array([[0.0, 0.0, 3.0]], jnp.float32)
    bg_color = jnp.array([1.0, 1.0, 1.0], jnp.float32)

    # tile_faces=128 so this small test exercises the tiled / accumulated
    # face-axis path (F=300 -> 3 face blocks).
    images = hard_gouraud_shader_forward(
        verts, normals, vcolors, faces, pix_to_face, bary,
        light_location, l_amb, l_dif, l_spec,
        m_amb, m_dif, m_spec, shininess, cam_center, bg_color,
        tile_pixels=4096, tile_faces=128)
    images = jax.block_until_ready(images)

    ref = reference_forward(
        verts, normals, vcolors, faces, pix_to_face, bary,
        light_location, l_amb, l_dif, l_spec,
        m_amb, m_dif, m_spec, shininess, cam_center, bg_color)

    assert images.shape == (N, H, W, 4) and images.dtype == jnp.float32
    # hi/lo bf16 split makes the MXU gather ~f32-accurate; remaining diffs are
    # f32 rounding / rsqrt-vs-div ordering only.
    assert jnp.allclose(images, ref, atol=3e-4, rtol=3e-3), "mismatch vs reference"
    print("KERNEL_OK")
</pallas_src>

<mosaic_0001>
module attributes {stable_mosaic.version = 11 : i64} {
  func.func @_vertex_shade_kernel(%arg0: i32, %arg1: memref<9x3xf32, #tpu.memory_space<smem>>, %arg2: memref<3x128xf32, #tpu.memory_space<vmem>>, %arg3: memref<3x128xf32, #tpu.memory_space<vmem>>, %arg4: memref<3x128xf32, #tpu.memory_space<vmem>>, %arg5: memref<3x128xf32, #tpu.memory_space<vmem>>) attributes {dimension_semantics = [#tpu.dimension_semantics<parallel>], iteration_bounds = array<i64: 1>, scalar_prefetch = 0 : i64, scratch_operands = 0 : i64, tpu.core_type = #tpu.core_type<tc>, window_params = [{transform_indices = @transform_0, window_bounds = array<i64: 9, 3>}, {transform_indices = @transform_1, window_bounds = array<i64: 3, 128>}, {transform_indices = @transform_2, window_bounds = array<i64: 3, 128>}, {transform_indices = @transform_3, window_bounds = array<i64: 3, 128>}, {transform_indices = @transform_4, window_bounds = array<i64: 3, 128>}]} {
    %c0 = arith.constant 0 : index
    %c0_0 = arith.constant 0 : index
    %0 = memref.load %arg1[%c0, %c0_0] : memref<9x3xf32, #tpu.memory_space<smem>>
    %c0_1 = arith.constant 0 : index
    %c1 = arith.constant 1 : index
    %1 = memref.load %arg1[%c0_1, %c1] : memref<9x3xf32, #tpu.memory_space<smem>>
    %c0_2 = arith.constant 0 : index
    %c2 = arith.constant 2 : index
    %2 = memref.load %arg1[%c0_2, %c2] : memref<9x3xf32, #tpu.memory_space<smem>>
    %c1_3 = arith.constant 1 : index
    %c0_4 = arith.constant 0 : index
    %3 = memref.load %arg1[%c1_3, %c0_4] : memref<9x3xf32, #tpu.memory_space<smem>>
    %c1_5 = arith.constant 1 : index
    %c1_6 = arith.constant 1 : index
    %4 = memref.load %arg1[%c1_5, %c1_6] : memref<9x3xf32, #tpu.memory_space<smem>>
    %c1_7 = arith.constant 1 : index
    %c2_8 = arith.constant 2 : index
    %5 = memref.load %arg1[%c1_7, %c2_8] : memref<9x3xf32, #tpu.memory_space<smem>>
    %c2_9 = arith.constant 2 : index
    %c0_10 = arith.constant 0 : index
    %6 = memref.load %arg1[%c2_9, %c0_10] : memref<9x3xf32, #tpu.memory_space<smem>>
    %c2_11 = arith.constant 2 : index
    %c1_12 = arith.constant 1 : index
    %7 = memref.load %arg1[%c2_11, %c1_12] : memref<9x3xf32, #tpu.memory_space<smem>>
    %c2_13 = arith.constant 2 : index
    %c2_14 = arith.constant 2 : index
    %8 = memref.load %arg1[%c2_13, %c2_14] : memref<9x3xf32, #tpu.memory_space<smem>>
    %c3 = arith.constant 3 : index
    %c0_15 = arith.constant 0 : index
    %9 = memref.load %arg1[%c3, %c0_15] : memref<9x3xf32, #tpu.memory_space<smem>>
    %c3_16 = arith.constant 3 : index
    %c1_17 = arith.constant 1 : index
    %10 = memref.load %arg1[%c3_16, %c1_17] : memref<9x3xf32, #tpu.memory_space<smem>>
    %c3_18 = arith.constant 3 : index
    %c2_19 = arith.constant 2 : index
    %11 = memref.load %arg1[%c3_18, %c2_19] : memref<9x3xf32, #tpu.memory_space<smem>>
    %c4 = arith.constant 4 : index
    %c0_20 = arith.constant 0 : index
    %12 = memref.load %arg1[%c4, %c0_20] : memref<9x3xf32, #tpu.memory_space<smem>>
    %c4_21 = arith.constant 4 : index
    %c1_22 = arith.constant 1 : index
    %13 = memref.load %arg1[%c4_21, %c1_22] : memref<9x3xf32, #tpu.memory_space<smem>>
    %c4_23 = arith.constant 4 : index
    %c2_24 = arith.constant 2 : index
    %14 = memref.load %arg1[%c4_23, %c2_24] : memref<9x3xf32, #tpu.memory_space<smem>>
    %c5 = arith.constant 5 : index
    %c0_25 = arith.constant 0 : index
    %15 = memref.load %arg1[%c5, %c0_25] : memref<9x3xf32, #tpu.memory_space<smem>>
    %c5_26 = arith.constant 5 : index
    %c1_27 = arith.constant 1 : index
    %16 = memref.load %arg1[%c5_26, %c1_27] : memref<9x3xf32, #tpu.memory_space<smem>>
    %c5_28 = arith.constant 5 : index
    %c2_29 = arith.constant 2 : index
    %17 = memref.load %arg1[%c5_28, %c2_29] : memref<9x3xf32, #tpu.memory_space<smem>>
    %c6 = arith.constant 6 : index
    %c0_30 = arith.constant 0 : index
    %18 = memref.load %arg1[%c6, %c0_30] : memref<9x3xf32, #tpu.memory_space<smem>>
    %c6_31 = arith.constant 6 : index
    %c1_32 = arith.constant 1 : index
    %19 = memref.load %arg1[%c6_31, %c1_32] : memref<9x3xf32, #tpu.memory_space<smem>>
    %c6_33 = arith.constant 6 : index
    %c2_34 = arith.constant 2 : index
    %20 = memref.load %arg1[%c6_33, %c2_34] : memref<9x3xf32, #tpu.memory_space<smem>>
    %c7 = arith.constant 7 : index
    %c0_35 = arith.constant 0 : index
    %21 = memref.load %arg1[%c7, %c0_35] : memref<9x3xf32, #tpu.memory_space<smem>>
    %c7_36 = arith.constant 7 : index
    %c1_37 = arith.constant 1 : index
    %22 = memref.load %arg1[%c7_36, %c1_37] : memref<9x3xf32, #tpu.memory_space<smem>>
    %c7_38 = arith.constant 7 : index
    %c2_39 = arith.constant 2 : index
    %23 = memref.load %arg1[%c7_38, %c2_39] : memref<9x3xf32, #tpu.memory_space<smem>>
    %c8 = arith.constant 8 : index
    %c0_40 = arith.constant 0 : index
    %24 = memref.load %arg1[%c8, %c0_40] : memref<9x3xf32, #tpu.memory_space<smem>>
    %c0_41 = arith.constant 0 : index
    %c0_42 = arith.constant 0 : index
    %25 = vector.load %arg2[%c0_41, %c0_42] : memref<3x128xf32, #tpu.memory_space<vmem>>, vector<1x128xf32>
    %c1_43 = arith.constant 1 : index
    %c0_44 = arith.constant 0 : index
    %26 = vector.load %arg2[%c1_43, %c0_44] : memref<3x128xf32, #tpu.memory_space<vmem>>, vector<1x128xf32>
    %c2_45 = arith.constant 2 : index
    %c0_46 = arith.constant 0 : index
    %27 = vector.load %arg2[%c2_45, %c0_46] : memref<3x128xf32, #tpu.memory_space<vmem>>, vector<1x128xf32>
    %c0_47 = arith.constant 0 : index
    %c0_48 = arith.constant 0 : index
    %28 = vector.load %arg3[%c0_47, %c0_48] : memref<3x128xf32, #tpu.memory_space<vmem>>, vector<1x128xf32>
    %c1_49 = arith.constant 1 : index
    %c0_50 = arith.constant 0 : index
    %29 = vector.load %arg3[%c1_49, %c0_50] : memref<3x128xf32, #tpu.memory_space<vmem>>, vector<1x128xf32>
    %c2_51 = arith.constant 2 : index
    %c0_52 = arith.constant 0 : index
    %30 = vector.load %arg3[%c2_51, %c0_52] : memref<3x128xf32, #tpu.memory_space<vmem>>, vector<1x128xf32>
    %31 = arith.mulf %28, %28 : vector<1x128xf32>
    %32 = arith.mulf %29, %29 : vector<1x128xf32>
    %33 = arith.addf %31, %32 : vector<1x128xf32>
    %34 = arith.mulf %30, %30 : vector<1x128xf32>
    %35 = arith.addf %33, %34 : vector<1x128xf32>
    %cst = arith.constant 9.99999996E-13 : f32
    %36 = vector.broadcast %cst : f32 to vector<1x128xf32>
    %37 = arith.maximumf %35, %36 : vector<1x128xf32>
    %38 = math.rsqrt %37 : vector<1x128xf32>
    %39 = arith.mulf %28, %38 : vector<1x128xf32>
    %40 = arith.mulf %29, %38 : vector<1x128xf32>
    %41 = arith.mulf %30, %38 : vector<1x128xf32>
    %42 = vector.broadcast %0 : f32 to vector<1x128xf32>
    %43 = arith.subf %42, %25 : vector<1x128xf32>
    %44 = vector.broadcast %1 : f32 to vector<1x128xf32>
    %45 = arith.subf %44, %26 : vector<1x128xf32>
    %46 = vector.broadcast %2 : f32 to vector<1x128xf32>
    %47 = arith.subf %46, %27 : vector<1x128xf32>
    %48 = arith.mulf %43, %43 : vector<1x128xf32>
    %49 = arith.mulf %45, %45 : vector<1x128xf32>
    %50 = arith.addf %48, %49 : vector<1x128xf32>
    %51 = arith.mulf %47, %47 : vector<1x128xf32>
    %52 = arith.addf %50, %51 : vector<1x128xf32>
    %cst_53 = arith.constant 9.99999996E-13 : f32
    %53 = vector.broadcast %cst_53 : f32 to vector<1x128xf32>
    %54 = arith.maximumf %52, %53 : vector<1x128xf32>
    %55 = math.rsqrt %54 : vector<1x128xf32>
    %56 = arith.mulf %43, %55 : vector<1x128xf32>
    %57 = arith.mulf %45, %55 : vector<1x128xf32>
    %58 = arith.mulf %47, %55 : vector<1x128xf32>
    %59 = arith.mulf %39, %56 : vector<1x128xf32>
    %60 = arith.mulf %40, %57 : vector<1x128xf32>
    %61 = arith.addf %59, %60 : vector<1x128xf32>
    %62 = arith.mulf %41, %58 : vector<1x128xf32>
    %63 = arith.addf %61, %62 : vector<1x128xf32>
    %cst_54 = arith.constant 0.000000e+00 : f32
    %64 = vector.broadcast %cst_54 : f32 to vector<1x128xf32>
    %65 = arith.maximumf %63, %64 : vector<1x128xf32>
    %cst_55 = arith.constant 0.000000e+00 : f32
    %66 = vector.broadcast %cst_55 : f32 to vector<1x128xf32>
    %67 = arith.cmpf ogt, %63, %66 : vector<1x128xf32>
    %cst_56 = arith.constant 1.000000e+00 : f32
    %cst_57 = arith.constant 0.000000e+00 : f32
    %68 = vector.broadcast %cst_56 : f32 to vector<1x128xf32>
    %69 = vector.broadcast %cst_57 : f32 to vector<1x128xf32>
    %70 = arith.select %67, %68, %69 : vector<1x128xi1>, vector<1x128xf32>
    %71 = vector.broadcast %21 : f32 to vector<1x128xf32>
    %72 = arith.subf %71, %25 : vector<1x128xf32>
    %73 = vector.broadcast %22 : f32 to vector<1x128xf32>
    %74 = arith.subf %73, %26 : vector<1x128xf32>
    %75 = vector.broadcast %23 : f32 to vector<1x128xf32>
    %76 = arith.subf %75, %27 : vector<1x128xf32>
    %77 = arith.mulf %72, %72 : vector<1x128xf32>
    %78 = arith.mulf %74, %74 : vector<1x128xf32>
    %79 = arith.addf %77, %78 : vector<1x128xf32>
    %80 = arith.mulf %76, %76 : vector<1x128xf32>
    %81 = arith.addf %79, %80 : vector<1x128xf32>
    %cst_58 = arith.constant 9.99999996E-13 : f32
    %82 = vector.broadcast %cst_58 : f32 to vector<1x128xf32>
    %83 = arith.maximumf %81, %82 : vector<1x128xf32>
    %84 = math.rsqrt %83 : vector<1x128xf32>
    %85 = arith.mulf %72, %84 : vector<1x128xf32>
    %86 = arith.mulf %74, %84 : vector<1x128xf32>
    %87 = arith.mulf %76, %84 : vector<1x128xf32>
    %cst_59 = arith.constant 0.000000e+00 : f32
    %88 = vector.broadcast %cst_59 : f32 to vector<1x128xf32>
    %89 = arith.subf %88, %56 : vector<1x128xf32>
    %cst_60 = arith.constant 2.000000e+00 : f32
    %90 = vector.broadcast %cst_60 : f32 to vector<1x128xf32>
    %91 = arith.mulf %90, %63 : vector<1x128xf32>
    %92 = arith.mulf %91, %39 : vector<1x128xf32>
    %93 = arith.addf %89, %92 : vector<1x128xf32>
    %cst_61 = arith.constant 0.000000e+00 : f32
    %94 = vector.broadcast %cst_61 : f32 to vector<1x128xf32>
    %95 = arith.subf %94, %57 : vector<1x128xf32>
    %cst_62 = arith.constant 2.000000e+00 : f32
    %96 = vector.broadcast %cst_62 : f32 to vector<1x128xf32>
    %97 = arith.mulf %96, %63 : vector<1x128xf32>
    %98 = arith.mulf %97, %40 : vector<1x128xf32>
    %99 = arith.addf %95, %98 : vector<1x128xf32>
    %cst_63 = arith.constant 0.000000e+00 : f32
    %100 = vector.broadcast %cst_63 : f32 to vector<1x128xf32>
    %101 = arith.subf %100, %58 : vector<1x128xf32>
    %cst_64 = arith.constant 2.000000e+00 : f32
    %102 = vector.broadcast %cst_64 : f32 to vector<1x128xf32>
    %103 = arith.mulf %102, %63 : vector<1x128xf32>
    %104 = arith.mulf %103, %41 : vector<1x128xf32>
    %105 = arith.addf %101, %104 : vector<1x128xf32>
    %106 = arith.mulf %85, %93 : vector<1x128xf32>
    %107 = arith.mulf %86, %99 : vector<1x128xf32>
    %108 = arith.addf %106, %107 : vector<1x128xf32>
    %109 = arith.mulf %87, %105 : vector<1x128xf32>
    %110 = arith.addf %108, %109 : vector<1x128xf32>
    %cst_65 = arith.constant 0.000000e+00 : f32
    %111 = vector.broadcast %cst_65 : f32 to vector<1x128xf32>
    %112 = arith.maximumf %110, %111 : vector<1x128xf32>
    %113 = arith.mulf %112, %70 : vector<1x128xf32>
    %cst_66 = arith.constant 0.000000e+00 : f32
    %114 = vector.broadcast %cst_66 : f32 to vector<1x128xf32>
    %115 = arith.cmpf ogt, %113, %114 : vector<1x128xf32>
    %cst_67 = arith.constant 1.000000e-30 : f32
    %116 = vector.broadcast %cst_67 : f32 to vector<1x128xf32>
    %117 = arith.maximumf %113, %116 : vector<1x128xf32>
    %118 = math.log %117 : vector<1x128xf32>
    %119 = vector.broadcast %24 : f32 to vector<1x128xf32>
    %120 = arith.mulf %119, %118 : vector<1x128xf32>
    %121 = math.exp %120 : vector<1x128xf32>
    %cst_68 = arith.constant 0.000000e+00 : f32
    %122 = vector.broadcast %cst_68 : f32 to vector<1x128xf32>
    %123 = arith.select %115, %121, %122 : vector<1x128xi1>, vector<1x128xf32>
    %c0_69 = arith.constant 0 : index
    %c0_70 = arith.constant 0 : index
    %124 = vector.load %arg4[%c0_69, %c0_70] : memref<3x128xf32, #tpu.memory_space<vmem>>, vector<1x128xf32>
    %125 = arith.mulf %12, %3 : f32
    %126 = arith.mulf %15, %6 : f32
    %127 = vector.broadcast %126 : f32 to vector<1x128xf32>
    %128 = arith.mulf %127, %65 : vector<1x128xf32>
    %129 = vector.broadcast %125 : f32 to vector<1x128xf32>
    %130 = arith.addf %129, %128 : vector<1x128xf32>
    %131 = arith.mulf %124, %130 : vector<1x128xf32>
    %132 = arith.mulf %18, %9 : f32
    %133 = vector.broadcast %132 : f32 to vector<1x128xf32>
    %134 = arith.mulf %133, %123 : vector<1x128xf32>
    %135 = arith.addf %131, %134 : vector<1x128xf32>
    %c0_71 = arith.constant 0 : index
    %c0_72 = arith.constant 0 : index
    %136 = vector.load %arg5[%c0_71, %c0_72] : memref<3x128xf32, #tpu.memory_space<vmem>>, vector<1x128xf32>
    tpu.vector_store %arg5[%c0_71, %c0_72], %135 {strides = array<i32>} : memref<3x128xf32, #tpu.memory_space<vmem>>, vector<1x128xf32>,
    %c1_73 = arith.constant 1 : index
    %c0_74 = arith.constant 0 : index
    %137 = vector.load %arg4[%c1_73, %c0_74] : memref<3x128xf32, #tpu.memory_space<vmem>>, vector<1x128xf32>
    %138 = arith.mulf %13, %4 : f32
    %139 = arith.mulf %16, %7 : f32
    %140 = vector.broadcast %139 : f32 to vector<1x128xf32>
    %141 = arith.mulf %140, %65 : vector<1x128xf32>
    %142 = vector.broadcast %138 : f32 to vector<1x128xf32>
    %143 = arith.addf %142, %141 : vector<1x128xf32>
    %144 = arith.mulf %137, %143 : vector<1x128xf32>
    %145 = arith.mulf %19, %10 : f32
    %146 = vector.broadcast %145 : f32 to vector<1x128xf32>
    %147 = arith.mulf %146, %123 : vector<1x128xf32>
    %148 = arith.addf %144, %147 : vector<1x128xf32>
    %c1_75 = arith.constant 1 : index
    %c0_76 = arith.constant 0 : index
    %149 = vector.load %arg5[%c1_75, %c0_76] : memref<3x128xf32, #tpu.memory_space<vmem>>, vector<1x128xf32>
    tpu.vector_store %arg5[%c1_75, %c0_76], %148 {strides = array<i32>} : memref<3x128xf32, #tpu.memory_space<vmem>>, vector<1x128xf32>,
    %c2_77 = arith.constant 2 : index
    %c0_78 = arith.constant 0 : index
    %150 = vector.load %arg4[%c2_77, %c0_78] : memref<3x128xf32, #tpu.memory_space<vmem>>, vector<1x128xf32>
    %151 = arith.mulf %14, %5 : f32
    %152 = arith.mulf %17, %8 : f32
    %153 = vector.broadcast %152 : f32 to vector<1x128xf32>
    %154 = arith.mulf %153, %65 : vector<1x128xf32>
    %155 = vector.broadcast %151 : f32 to vector<1x128xf32>
    %156 = arith.addf %155, %154 : vector<1x128xf32>
    %157 = arith.mulf %150, %156 : vector<1x128xf32>
    %158 = arith.mulf %20, %11 : f32
    %159 = vector.broadcast %158 : f32 to vector<1x128xf32>
    %160 = arith.mulf %159, %123 : vector<1x128xf32>
    %161 = arith.addf %157, %160 : vector<1x128xf32>
    %c2_79 = arith.constant 2 : index
    %c0_80 = arith.constant 0 : index
    %162 = vector.load %arg5[%c2_79, %c0_80] : memref<3x128xf32, #tpu.memory_space<vmem>>, vector<1x128xf32>
    tpu.vector_store %arg5[%c2_79, %c0_80], %161 {strides = array<i32>} : memref<3x128xf32, #tpu.memory_space<vmem>>, vector<1x128xf32>,
    return
  }
  func.func @transform_0(%arg0: i32) -> (i32, i32) {
    %c0_i32 = arith.constant 0 : i32
    %c0_i32_0 = arith.constant 0 : i32
    %c0_i32_1 = arith.constant 0 : i32
    return %c0_i32, %c0_i32_0 : i32, i32
  }
  func.func @transform_1(%arg0: i32) -> (i32, i32) {
    %c0_i32 = arith.constant 0 : i32
    %c0_i32_0 = arith.constant 0 : i32
    return %c0_i32, %arg0 : i32, i32
  }
  func.func @transform_2(%arg0: i32) -> (i32, i32) {
    %c0_i32 = arith.constant 0 : i32
    %c0_i32_0 = arith.constant 0 : i32
    return %c0_i32, %arg0 : i32, i32
  }
  func.func @transform_3(%arg0: i32) -> (i32, i32) {
    %c0_i32 = arith.constant 0 : i32
    %c0_i32_0 = arith.constant 0 : i32
    return %c0_i32, %arg0 : i32, i32
  }
  func.func @transform_4(%arg0: i32) -> (i32, i32) {
    %c0_i32 = arith.constant 0 : i32
    %c0_i32_0 = arith.constant 0 : i32
    return %c0_i32, %arg0 : i32, i32
  }
}

</mosaic_0001>

<llo_original>
// kernel: tpu_custom_call.1
$region0: #{tpu_custom_call.1}
  #allocation0 [shape = 'u32[]', space=smem, size = 0x4, offset = 0x4, fixed_abs, tag = 'smem constant byte address 0x4 - core index']
  #allocation1 [shape = 'u32[144,128]{1,0:T(1,128)}', space=vmem, size = 0x12000, scoped, tag = 'internal scratch']
  %s0 = inlined_call_operand.vmem [shape: f32[9,3], index: 0, kind: input, shape index: {}]
  %s1 = inlined_call_operand.vmem [shape: f32[3,128], index: 1, kind: input, shape index: {}]
  %s2 = inlined_call_operand.vmem [shape: f32[3,128], index: 2, kind: input, shape index: {}]
  %s3 = inlined_call_operand.vmem [shape: f32[3,128], index: 3, kind: input, shape index: {}]
  %s4 = inlined_call_operand.hbm [shape: f32[3,128], index: 4, kind: output, shape index: {}]
  %s5 = sld [smem:[#allocation0]]
  $region30: #{tpu_custom_call.1} parent=0
    _
  %s7 = ssub.s32 1, %s5
  %s8 = scalar_select 0, %s7, %s5
  $region1: #{tpu_custom_call.1} parent=0
    #allocation2 [shape = 'u8[8192]{0}', space=smem, size = 0x2000, scoped, tag = 'input window, operand 0, single buffered']
    #allocation3 [shape = 's32[1]{0}', space=sflag, size = 0x4, scoped, tag = 'scoped memory for tpu_custom_call.1']
    #allocation4 [shape = 's32[1]{0}', space=sflag, size = 0x4, scoped, tag = 'scoped memory for tpu_custom_call.1']
    #allocation5 [shape = 'u8[2048]{0}', space=vmem, size = 0x800, scoped, tag = 'output window, operand 0, single buffered']
    %9 = vsyncpa [#allocation4], 0
    %10 = vsyncpa [#allocation3], 0
    // Predicated region
    $region2: #{tpu_custom_call.1} parent=1 // pred_check
      _
    $region3: #{tpu_custom_call.1} parent=1 // pred_check_branch
      %12 = sbr.rel (0) target = $region5
    $region4: #{tpu_custom_call.1} parent=1 // pred_region
      %s14 = ssub.s32 256, 256
      %15 = vsyncadd [#allocation4], %s14
      %s16 = sshll.u32 %s0, 4
      %s17 = int_to_ptr.vmem [resolvable:$true] %s16
      %22 = dma.vmem_to_smem %s17, 256, [#allocation2], [#allocation4], 128, 128, 8
    $region5: #{tpu_custom_call.1} parent=1 // pred_fallthru
      _
    // Predicated region
    $region6: #{tpu_custom_call.1} parent=1 // pred_check
      _
    $region7: #{tpu_custom_call.1} parent=1 // pred_check_branch
      %24 = sbr.rel (0) target = $region9
    $region8: #{tpu_custom_call.1} parent=1 // pred_region
      _
    $region9: #{tpu_custom_call.1} parent=1 // pred_fallthru
      _
    // Predicated region
    $region10: #{tpu_custom_call.1} parent=1 // pred_check
      _
    $region11: #{tpu_custom_call.1} parent=1 // pred_check_branch
      %26 = sbr.rel (0) target = $region13
    $region12: #{tpu_custom_call.1} parent=1 // pred_region
      _
    $region13: #{tpu_custom_call.1} parent=1 // pred_fallthru
      _
    // Predicated region
    $region14: #{tpu_custom_call.1} parent=1 // pred_check
      _
    $region15: #{tpu_custom_call.1} parent=1 // pred_check_branch
      %28 = sbr.rel (0) target = $region17
    $region16: #{tpu_custom_call.1} parent=1 // pred_region
      _
    $region17: #{tpu_custom_call.1} parent=1 // pred_fallthru
      _
    // Predicated region
    $region18: #{tpu_custom_call.1} parent=1 // pred_check
      _
    $region19: #{tpu_custom_call.1} parent=1 // pred_check_branch
      %30 = sbr.rel (0) target = $region21
    $region20: #{tpu_custom_call.1} parent=1 // pred_region
      %31 = dma.done [#allocation4], 256
    $region21: #{tpu_custom_call.1} parent=1 // pred_fallthru
      _
    %32 = sfence
    %s33 = sld [smem:[#allocation2]]
    %s34 = sld [smem:[#allocation2 + $0x1]]
    %s35 = sld [smem:[#allocation2 + $0x2]]
    %s36 = sld [smem:[#allocation2 + $0x80]]
    %s37 = sld [smem:[#allocation2 + $0x81]]
    %s38 = sld [smem:[#allocation2 + $0x82]]
    %s39 = sld [smem:[#allocation2 + $0x100]]
    %s40 = sld [smem:[#allocation2 + $0x101]]
    %s41 = sld [smem:[#allocation2 + $0x102]]
    %s42 = sld [smem:[#allocation2 + $0x180]]
    %s43 = sld [smem:[#allocation2 + $0x181]]
    %s44 = sld [smem:[#allocation2 + $0x182]]
    %s45 = sld [smem:[#allocation2 + $0x200]]
    %s46 = sld [smem:[#allocation2 + $0x201]]
    %s47 = sld [smem:[#allocation2 + $0x202]]
    %s48 = sld [smem:[#allocation2 + $0x280]]
    %s49 = sld [smem:[#allocation2 + $0x281]]
    %s50 = sld [smem:[#allocation2 + $0x282]]
    %s51 = sld [smem:[#allocation2 + $0x300]]
    %s52 = sld [smem:[#allocation2 + $0x301]]
    %s53 = sld [smem:[#allocation2 + $0x302]]
    %s54 = sld [smem:[#allocation2 + $0x380]]
    %s55 = sld [smem:[#allocation2 + $0x381]]
    %s56 = sld [smem:[#allocation2 + $0x382]]
    %s57 = sld [smem:[#allocation2 + $0x400]]
    %v58 = vld [vmem:[%s1] sm:$0x1]
    %v59 = vld [vmem:[%s1 + $0x1] sm:$0x1]
    %v60 = vld [vmem:[%s1 + $0x2] sm:$0x1]
    %v61 = vld [vmem:[%s2] sm:$0x1]
    %v62 = vld [vmem:[%s2 + $0x1] sm:$0x1]
    %v63 = vld [vmem:[%s2 + $0x2] sm:$0x1]
    %v64 = vmul.f32 %v61, %v61
    %v65 = vmul.f32 %v62, %v62
    %v66 = vadd.f32 %v64, %v65
    %v67 = vmul.f32 %v63, %v63
    %v68 = vadd.f32 %v66, %v67
    %v69 = vmax.f32 %v68, 1e-12
    %v70 = vrsqrt.pop %v69
    %v71 = vmul.f32 %v61, %v70
    %v72 = vmul.f32 %v62, %v70
    %v73 = vmul.f32 %v63, %v70
    %v74 = vstv %s33
    %v75 = vsub.f32 %v74, %v58
    %v76 = vstv %s34
    %v77 = vsub.f32 %v76, %v59
    %v78 = vstv %s35
    %v79 = vsub.f32 %v78, %v60
    %v80 = vmul.f32 %v75, %v75
    %v81 = vmul.f32 %v77, %v77
    %v82 = vadd.f32 %v80, %v81
    %v83 = vmul.f32 %v79, %v79
    %v84 = vadd.f32 %v82, %v83
    %v85 = vmax.f32 %v84, 1e-12
    %v86 = vrsqrt.pop %v85
    %v87 = vmul.f32 %v75, %v86
    %v88 = vmul.f32 %v77, %v86
    %v89 = vmul.f32 %v79, %v86
    %v90 = vmul.f32 %v71, %v87
    %v91 = vmul.f32 %v72, %v88
    %v92 = vadd.f32 %v90, %v91
    %v93 = vmul.f32 %v73, %v89
    %v94 = vadd.f32 %v92, %v93
    %v95 = vmax.f32 %v94, 0.0
    %vm96 = vcmp.gt.f32.partialorder %v94, 0.0
    %v97 = vsel %vm96, 1.0, 0.0
    %v98 = vstv %s54
    %v99 = vsub.f32 %v98, %v58
    %v100 = vstv %s55
    %v101 = vsub.f32 %v100, %v59
    %v102 = vstv %s56
    %v103 = vsub.f32 %v102, %v60
    %v104 = vmul.f32 %v99, %v99
    %v105 = vmul.f32 %v101, %v101
    %v106 = vadd.f32 %v104, %v105
    %v107 = vmul.f32 %v103, %v103
    %v108 = vadd.f32 %v106, %v107
    %v109 = vmax.f32 %v108, 1e-12
    %v110 = vrsqrt.pop %v109
    %v111 = vmul.f32 %v99, %v110
    %v112 = vmul.f32 %v101, %v110
    %v113 = vmul.f32 %v103, %v110
    %v114 = vsub.f32 0.0, %v87
    %v115 = vmul.f32 %v94, 2.0
    %v116 = vmul.f32 %v115, %v71
    %v117 = vadd.f32 %v114, %v116
    %v118 = vsub.f32 0.0, %v88
    %v119 = vmul.f32 %v115, %v72
    %v120 = vadd.f32 %v118, %v119
    %v121 = vsub.f32 0.0, %v89
    %v122 = vmul.f32 %v115, %v73
    %v123 = vadd.f32 %v121, %v122
    %v124 = vmul.f32 %v111, %v117
    %v125 = vmul.f32 %v112, %v120
    %v126 = vadd.f32 %v124, %v125
    %v127 = vmul.f32 %v113, %v123
    %v128 = vadd.f32 %v126, %v127
    %v129 = vmax.f32 %v128, 0.0
    %v130 = vmul.f32 %v129, %v97
    %vm131 = vcmp.gt.f32.partialorder %v130, 0.0
    %v132 = vmax.f32 %v130, 1e-30
    %v133 = vlog2.pop %v132
    %v134 = vmul.f32 %v133, 0.6931472
    %v135 = vstv %s57
    %v136 = vmul.f32 %v135, %v134
    %v137 = vmul.f32 %v136, 1.442695
    %v138 = vpow.pop %v137
    %v139 = vsel %vm131, %v138, 0.0
    %v140 = vld [vmem:[%s3] sm:$0x1]
    %s141 = smul.f32 %s45, %s36
    %s142 = smul.f32 %s48, %s39
    %v143 = vstv %s142
    %v144 = vmul.f32 %v143, %v95
    %v145 = vstv %s141
    %v146 = vadd.f32 %v145, %v144
    %v147 = vmul.f32 %v140, %v146
    %s148 = smul.f32 %s51, %s42
    %v149 = vstv %s148
    %v150 = vmul.f32 %v149, %v139
    %v151 = vadd.f32 %v147, %v150
    %152 = vst [vmem:[#allocation5] sm:$0x1] %v151
    %v153 = vld [vmem:[%s3 + $0x1] sm:$0x1]
    %s154 = smul.f32 %s46, %s37
    %s155 = smul.f32 %s49, %s40
    %v156 = vstv %s155
    %v157 = vmul.f32 %v156, %v95
    %v158 = vstv %s154
    %v159 = vadd.f32 %v158, %v157
    %v160 = vmul.f32 %v153, %v159
    %s161 = smul.f32 %s52, %s43
    %v162 = vstv %s161
    %v163 = vmul.f32 %v162, %v139
    %v164 = vadd.f32 %v160, %v163
    %165 = vst [vmem:[#allocation5 + $0x1] sm:$0x1] %v164
    %v166 = vld [vmem:[%s3 + $0x2] sm:$0x1]
    %s167 = smul.f32 %s47, %s38
    %s168 = smul.f32 %s50, %s41
    %v169 = vstv %s168
    %v170 = vmul.f32 %v169, %v95
    %v171 = vstv %s167
    %v172 = vadd.f32 %v171, %v170
    %v173 = vmul.f32 %v166, %v172
    %s174 = smul.f32 %s53, %s44
    %v175 = vstv %s174
    %v176 = vmul.f32 %v175, %v139
    %v177 = vadd.f32 %v173, %v176
    %178 = vst [vmem:[#allocation5 + $0x2] sm:$0x1] %v177
    // Predicated region
    $region22: #{tpu_custom_call.1} parent=1 // pred_check
      _
    $region23: #{tpu_custom_call.1} parent=1 // pred_check_branch
      %180 = sbr.rel (0) target = $region25
    $region24: #{tpu_custom_call.1} parent=1 // pred_region
      %s182 = ssub.s32 64, 64
      %183 = vsyncadd [#allocation3], %s182
      %s185 = sshll.u32 [#allocation5], 4
      %s186 = int_to_ptr.vmem [resolvable:$true] %s185
      %188 = dma.vmem_to_hbm [thread:$0]  %s186, 64, %s4, [#allocation3]
    $region25: #{tpu_custom_call.1} parent=1 // pred_fallthru
      _
    // Predicated region
    $region26: #{tpu_custom_call.1} parent=1 // pred_check
      _
    $region27: #{tpu_custom_call.1} parent=1 // pred_check_branch
      %190 = sbr.rel (0) target = $region29
    $region28: #{tpu_custom_call.1} parent=1 // pred_region
      %191 = dma.done [#allocation3], 64
    $region29: #{tpu_custom_call.1} parent=1 // pred_fallthru
      _
    %192 = vsyncpa [#allocation3], 1
    %193 = vsyncpa [#allocation4], 1

</llo_original>
